<compile_context>
chip_gen: v5e
topology: v5e:2x2
jax: 0.10.0
libtpu: 0.0.40
codegen_flags: <defaults>
</compile_context>

<pallas_src>
import numpy as np
import jax
import jax.numpy as jnp
from jax.experimental import pallas as pl
from jax.experimental.pallas import tpu as pltpu

ALPHA_SPATIAL = 0.2
ALPHA_PHYSICS = 0.05
ALPHA_TEMPORAL = 0.1


# ----------------------------------------------------------------------------
# Pallas kernel
# ----------------------------------------------------------------------------
def _loss_kernel(pred_ref, tgt_ref, params_ref, wstack_ref, out_ref):
    pred = pred_ref[...]            # (N, T)
    tgt = tgt_ref[...]              # (N, T)
    params = params_ref[...]        # (N, 7): [A(4) | w_adapt(1) | inv_cnt | inv_denom]
    W = wstack_ref[...]             # (2N + Kpad, N): [Wl ; Wr ; C_onehot(padded)]

    N, T = pred.shape
    K = W.shape[0] - 2 * N          # Kpad (zero-padded clusters contribute 0)

    A = params[:, 0:4]              # (N, 4) seasonal_amplitudes
    w_adapt = params[:, 4:5]        # (N, 1) spatial_adaptation_weights
    inv_cnt = params[0:K, 5:6]      # (K, 1) 1/count        (0 for empty/padded)
    inv_denom = params[0:K, 6:7]    # (K, 1) 1/(count-1)    (0 unless count > 1)

    # ---------------- primary: L1 loss ----------------
    row_abs = jnp.sum(jnp.abs(pred - tgt), axis=1, keepdims=True)        # (N, 1)
    primary = jnp.sum(row_abs, keepdims=True) * (1.0 / (N * T))          # (1, 1)

    # ---------------- temporal consistency ----------------
    # Cyclic consecutive diffs via a single lane rotate (XLU).  The math below
    # only uses squared cyclic diffs plus the endpoints, so it is independent
    # of the rotation direction.
    d_cyc = pltpu.roll(pred, 1, 1) - pred                                # (N, T)
    wrap = pred[:, T - 1:T] - pred[:, 0:1]                               # (N, 1) = sum of valid diffs
    sum_d2 = jnp.sum(d_cyc * d_cyc, axis=1, keepdims=True) - wrap * wrap # sum over T-1 valid diffs^2
    # unbiased variance of the (T-1)-length diff:  (sum d^2 - (sum d)^2/(T-1)) / (T-2)
    var = (sum_d2 - wrap * wrap * (1.0 / (T - 1.0))) * (1.0 / (T - 2.0))
    temporal = jnp.sum(jnp.maximum(var - 10.0, 0.0), keepdims=True) * (1.0 / N)

    # ---------------- enhanced spatial loss ----------------
    # One stacked MXU pass: [Wl; Wr; C] @ A
    R = jnp.dot(W, A, preferred_element_type=jnp.float32)               # (2N+K, 4)
    wm_local = R[0:N, :]
    wm_regional = R[N:2 * N, :]
    sums = R[2 * N:, :]                                                  # (K, 4) cluster sums
    C = W[2 * N:, :]                                                     # (K, N) one-hot (padded)
    sumsq = jnp.dot(C, A * A, preferred_element_type=jnp.float32)        # (K, 4)

    loss_local = jnp.sum((A - wm_local) ** 2, keepdims=True)
    loss_regional = jnp.sum((A - wm_regional) ** 2, keepdims=True)
    # unbiased within-cluster variance, valid-cluster masking folded into inv_denom
    cluster_loss = jnp.sum((sumsq - sums * sums * inv_cnt) * inv_denom, keepdims=True)
    spatial = (loss_local + 0.5 * loss_regional + 0.3 * cluster_loss) * (1.0 / (N * 4.0))

    # ---------------- physics regularization ----------------
    row_sum = jnp.sum(A, axis=1, keepdims=True)                          # (N, 1)
    amp_penalty = jnp.sum(jnp.maximum(row_sum - 80.0, 0.0), keepdims=True) * (1.0 / N)
    annual = A[:, 2:3]
    max_other = jnp.maximum(jnp.maximum(A[:, 0:1], A[:, 1:2]), A[:, 3:4])
    dom_penalty = jnp.sum(jnp.maximum(max_other - 2.0 * annual, 0.0), keepdims=True) * (1.0 / N)
    adapt_penalty = jnp.sum(w_adapt * w_adapt, keepdims=True) * (0.1 / N)
    physics = amp_penalty + dom_penalty + adapt_penalty

    # ---------------- total + packed single store ----------------
    total = (primary + ALPHA_SPATIAL * spatial
             + ALPHA_PHYSICS * physics + ALPHA_TEMPORAL * temporal)

    lane = jax.lax.broadcasted_iota(jnp.int32, (1, 128), 1)
    packed = (jnp.where(lane == 0, total, 0.0)
              + jnp.where(lane == 1, primary, 0.0)
              + jnp.where(lane == 2, spatial, 0.0)
              + jnp.where(lane == 3, physics, 0.0)
              + jnp.where(lane == 4, temporal, 0.0))
    out_ref[...] = packed


def enhanced_spatial_loss(predicted, target, seasonal_amplitudes,
                          spatial_adaptation_weights, w_stack, cluster_consts):
    """Returns (total_loss, dict of loss components), mirroring the PyTorch forward.

    w_stack:        (2N + Kpad, N) = [Wl ; Wr ; one-hot clusters (zero padded)]
    cluster_consts: (N, 2) host-precomputed [1/count, valid/(count-1)] padded to N rows.
    """
    n = predicted.shape[0]
    assert predicted.shape[1] > 2, "temporal variance needs n_timepoints > 2"
    assert w_stack.shape[0] - 2 * n <= n, "Kpad must be <= n_stations for param packing"

    params = jnp.concatenate(
        [seasonal_amplitudes.astype(jnp.float32),
         spatial_adaptation_weights.reshape(n, 1).astype(jnp.float32),
         cluster_consts.astype(jnp.float32)], axis=1)                    # (N, 7)

    vmem = pl.BlockSpec(memory_space=pltpu.MemorySpace.VMEM)
    packed = pl.pallas_call(
        _loss_kernel,
        out_shape=jax.ShapeDtypeStruct((1, 128), jnp.float32),
        in_specs=[vmem, vmem, vmem, vmem],
        out_specs=vmem,
    )(predicted, target, params, w_stack)

    components = {
        "primary": packed[0, 1],
        "spatial": packed[0, 2],
        "physics": packed[0, 3],
        "temporal": packed[0, 4],
    }
    return packed[0, 0], components


# ----------------------------------------------------------------------------
# Init-time glue replicating EnhancedSpatialInSARModel.__init__ structure
# (graphs / clusters) deterministically in numpy.
# ----------------------------------------------------------------------------
def _build_dense_neighbor_weights(coords, n_neighbors, factor):
    n = coords.shape[0]
    dmat = np.sqrt(((coords[:, None, :] - coords[None, :, :]) ** 2).sum(-1))
    order = np.argsort(dmat, axis=1)
    idx = order[:, 1:n_neighbors]                       # drop self
    dists = np.take_along_axis(dmat, idx, axis=1)
    weights = np.exp(-dists / dists.mean() * factor)    # global mean, as in torch ref
    weights = weights / (weights.sum(axis=1, keepdims=True) + 1e-6)
    W = np.zeros((n, n), dtype=np.float32)
    rows = np.repeat(np.arange(n), idx.shape[1])
    W[rows, idx.ravel()] = weights.ravel().astype(np.float32)
    return W


def _detect_clusters(coords, trend, n_stations):
    # TODO(synk): deterministic Lloyd's iterations stand in for sklearn
    # KMeans(random_state=42); this is init-time structure, not forward compute.
    feats = np.column_stack([coords, trend]).astype(np.float64)
    feats = (feats - feats.mean(0)) / (feats.std(0) + 1e-12)
    n_clusters = int(min(5, max(3, n_stations // 20)))
    centroids = feats[:n_clusters].copy()
    labels = np.zeros(n_stations, dtype=np.int64)
    for _ in range(25):
        dist = ((feats[:, None, :] - centroids[None, :, :]) ** 2).sum(-1)
        labels = dist.argmin(1)
        for c in range(n_clusters):
            m = labels == c
            if m.any():
                centroids[c] = feats[m].mean(0)
    onehot = np.zeros((n_clusters, n_stations), dtype=np.float32)
    onehot[labels, np.arange(n_stations)] = 1.0
    counts = onehot.sum(axis=1)
    return onehot, counts.astype(np.float64)


def _pack_graph_structure(w_local, w_regional, onehot, counts, n_stations):
    """Stack [Wl ; Wr ; C_pad] for one fused MXU pass and precompute cluster constants."""
    k = onehot.shape[0]
    k_pad = max(8, int(np.ceil(k / 8.0)) * 8)
    c_pad = np.zeros((k_pad, n_stations), dtype=np.float32)
    c_pad[:k] = onehot
    w_stack = np.concatenate(
        [w_local.astype(np.float32), w_regional.astype(np.float32), c_pad], axis=0)

    consts = np.zeros((n_stations, 2), dtype=np.float32)
    inv_cnt = np.where(counts > 0, 1.0 / np.maximum(counts, 1.0), 0.0)
    inv_den = np.where(counts > 1, 1.0 / np.maximum(counts - 1.0, 1.0), 0.0)
    consts[:k, 0] = inv_cnt
    consts[:k, 1] = inv_den
    return w_stack, consts


if __name__ == "__main__":
    N_STATIONS = 32
    N_TIMEPOINTS = 128   # native lane width: unmasked time-axis reductions / rotate

    key = jax.random.PRNGKey(0)
    k_coord, k_trend, k_pred, k_tgt = jax.random.split(key, 4)

    coords = np.asarray(jax.random.uniform(k_coord, (N_STATIONS, 2)) * 100.0,
                        dtype=np.float64)
    linear_trend = np.asarray(jax.random.normal(k_trend, (N_STATIONS,)) * 5.0,
                              dtype=np.float64)

    # predicted / target signals (inputs to the loss)
    predicted = (jax.random.normal(k_pred, (N_STATIONS, N_TIMEPOINTS)) * 10.0
                 ).astype(jnp.float32)
    target = (jax.random.normal(k_tgt, (N_STATIONS, N_TIMEPOINTS)) * 10.0
              ).astype(jnp.float32)

    # model parameters per EnhancedSpatialInSARModel.__init__
    seasonal_amplitudes = (jnp.ones((N_STATIONS, 4)) * 3.0).astype(jnp.float32)
    spatial_adaptation_weights = jnp.ones((N_STATIONS, 1), dtype=jnp.float32)

    # multi-scale graphs (local: 6-NN -> 5 neighbors, regional: 16-NN -> 15)
    w_local = _build_dense_neighbor_weights(coords, 6, factor=2.0)
    w_regional = _build_dense_neighbor_weights(coords, 16, factor=1.0)
    cluster_onehot, cluster_counts = _detect_clusters(coords, linear_trend, N_STATIONS)

    w_stack_np, cluster_consts_np = _pack_graph_structure(
        w_local, w_regional, cluster_onehot, cluster_counts, N_STATIONS)
    w_stack = jnp.asarray(w_stack_np)
    cluster_consts = jnp.asarray(cluster_consts_np)

    total_loss, components = enhanced_spatial_loss(
        predicted, target, seasonal_amplitudes, spatial_adaptation_weights,
        w_stack, cluster_consts)

    jax.block_until_ready(total_loss)
    jax.block_until_ready(components["primary"])
    print("KERNEL_OK")
</pallas_src>

<mosaic_0001>
module attributes {stable_mosaic.version = 11 : i64} {
  func.func @_loss_kernel(%arg0: memref<32x128xf32, #tpu.memory_space<vmem>>, %arg1: memref<32x128xf32, #tpu.memory_space<vmem>>, %arg2: memref<32x7xf32, #tpu.memory_space<vmem>>, %arg3: memref<72x32xf32, #tpu.memory_space<vmem>>, %arg4: memref<1x128xf32, #tpu.memory_space<vmem>>) attributes {dimension_semantics = [], scalar_prefetch = 0 : i64, scratch_operands = 0 : i64, tpu.core_type = #tpu.core_type<tc>} {
    %c0 = arith.constant 0 : index
    %c0_0 = arith.constant 0 : index
    %0 = vector.load %arg0[%c0, %c0_0] : memref<32x128xf32, #tpu.memory_space<vmem>>, vector<32x128xf32>
    %c0_1 = arith.constant 0 : index
    %c0_2 = arith.constant 0 : index
    %1 = vector.load %arg1[%c0_1, %c0_2] : memref<32x128xf32, #tpu.memory_space<vmem>>, vector<32x128xf32>
    %c0_3 = arith.constant 0 : index
    %c0_4 = arith.constant 0 : index
    %2 = vector.load %arg2[%c0_3, %c0_4] : memref<32x7xf32, #tpu.memory_space<vmem>>, vector<32x7xf32>
    %c0_5 = arith.constant 0 : index
    %c0_6 = arith.constant 0 : index
    %3 = vector.load %arg3[%c0_5, %c0_6] : memref<72x32xf32, #tpu.memory_space<vmem>>, vector<72x32xf32>
    %4 = vector.extract_strided_slice %2 {offsets = [0, 0], sizes = [32, 4], strides = [1, 1]} : vector<32x7xf32> to vector<32x4xf32>
    %5 = vector.extract_strided_slice %2 {offsets = [0, 4], sizes = [32, 1], strides = [1, 1]} : vector<32x7xf32> to vector<32x1xf32>
    %6 = vector.extract_strided_slice %2 {offsets = [0, 5], sizes = [8, 1], strides = [1, 1]} : vector<32x7xf32> to vector<8x1xf32>
    %7 = vector.extract_strided_slice %2 {offsets = [0, 6], sizes = [8, 1], strides = [1, 1]} : vector<32x7xf32> to vector<8x1xf32>
    %8 = arith.subf %0, %1 : vector<32x128xf32>
    %9 = math.absf %8 : vector<32x128xf32>
    %cst = arith.constant dense<0.000000e+00> : vector<32xf32>
    %10 = vector.multi_reduction <add>, %9, %cst [1] : vector<32x128xf32> to vector<32xf32>
    %11 = vector.shape_cast %10 : vector<32xf32> to vector<32x1xf32>
    %12 = vector.shape_cast %11 : vector<32x1xf32> to vector<1x32x1xf32>
    %cst_7 = arith.constant dense<0.000000e+00> : vector<1xf32>
    %13 = vector.multi_reduction <add>, %12, %cst_7 [1, 2] : vector<1x32x1xf32> to vector<1xf32>
    %14 = vector.shape_cast %13 : vector<1xf32> to vector<1x1x1xf32>
    %15 = vector.extract %14[0, 0, 0] : f32 from vector<1x1x1xf32>
    %16 = vector.broadcast %15 : f32 to vector<1x1xf32>
    %cst_8 = arith.constant 2.44140625E-4 : f32
    %17 = vector.broadcast %cst_8 : f32 to vector<1x1xf32>
    %18 = arith.mulf %16, %17 : vector<1x1xf32>
    %c1_i32 = arith.constant 1 : i32
    %19 = tpu.dynamic_rotate %0 by %c1_i32 dim 1 : vector<32x128xf32>, i32 -> vector<32x128xf32>
    %20 = arith.subf %19, %0 : vector<32x128xf32>
    %21 = vector.extract_strided_slice %0 {offsets = [0, 127], sizes = [32, 1], strides = [1, 1]} : vector<32x128xf32> to vector<32x1xf32>
    %22 = vector.extract_strided_slice %0 {offsets = [0, 0], sizes = [32, 1], strides = [1, 1]} : vector<32x128xf32> to vector<32x1xf32>
    %23 = arith.subf %21, %22 : vector<32x1xf32>
    %24 = arith.mulf %20, %20 : vector<32x128xf32>
    %cst_9 = arith.constant dense<0.000000e+00> : vector<32xf32>
    %25 = vector.multi_reduction <add>, %24, %cst_9 [1] : vector<32x128xf32> to vector<32xf32>
    %26 = vector.shape_cast %25 : vector<32xf32> to vector<32x1xf32>
    %27 = arith.mulf %23, %23 : vector<32x1xf32>
    %28 = arith.subf %26, %27 : vector<32x1xf32>
    %29 = arith.mulf %23, %23 : vector<32x1xf32>
    %cst_10 = arith.constant 0.00787401571 : f32
    %30 = vector.broadcast %cst_10 : f32 to vector<32x1xf32>
    %31 = arith.mulf %29, %30 : vector<32x1xf32>
    %32 = arith.subf %28, %31 : vector<32x1xf32>
    %cst_11 = arith.constant 0.00793650839 : f32
    %33 = vector.broadcast %cst_11 : f32 to vector<32x1xf32>
    %34 = arith.mulf %32, %33 : vector<32x1xf32>
    %cst_12 = arith.constant 1.000000e+01 : f32
    %35 = vector.broadcast %cst_12 : f32 to vector<32x1xf32>
    %36 = arith.subf %34, %35 : vector<32x1xf32>
    %cst_13 = arith.constant 0.000000e+00 : f32
    %37 = vector.broadcast %cst_13 : f32 to vector<32x1xf32>
    %38 = arith.maximumf %36, %37 : vector<32x1xf32>
    %39 = vector.shape_cast %38 : vector<32x1xf32> to vector<1x32x1xf32>
    %cst_14 = arith.constant dense<0.000000e+00> : vector<1xf32>
    %40 = vector.multi_reduction <add>, %39, %cst_14 [1, 2] : vector<1x32x1xf32> to vector<1xf32>
    %41 = vector.shape_cast %40 : vector<1xf32> to vector<1x1x1xf32>
    %42 = vector.extract %41[0, 0, 0] : f32 from vector<1x1x1xf32>
    %43 = vector.broadcast %42 : f32 to vector<1x1xf32>
    %cst_15 = arith.constant 3.125000e-02 : f32
    %44 = vector.broadcast %cst_15 : f32 to vector<1x1xf32>
    %45 = arith.mulf %43, %44 : vector<1x1xf32>
    %cst_16 = arith.constant dense<0.000000e+00> : vector<72x4xf32>
    %46 = tpu.matmul %3, %4, %cst_16 {dimension_numbers = #tpu.dot_dimension_numbers<[1], [0], [0], [1], [0, 0, 1, 1], [], []>} : vector<72x32xf32>, vector<32x4xf32>, vector<72x4xf32> -> vector<72x4xf32>
    %47 = vector.extract_strided_slice %46 {offsets = [0, 0], sizes = [32, 4], strides = [1, 1]} : vector<72x4xf32> to vector<32x4xf32>
    %48 = vector.extract_strided_slice %46 {offsets = [32, 0], sizes = [32, 4], strides = [1, 1]} : vector<72x4xf32> to vector<32x4xf32>
    %49 = vector.extract_strided_slice %46 {offsets = [64, 0], sizes = [8, 4], strides = [1, 1]} : vector<72x4xf32> to vector<8x4xf32>
    %50 = vector.extract_strided_slice %3 {offsets = [64, 0], sizes = [8, 32], strides = [1, 1]} : vector<72x32xf32> to vector<8x32xf32>
    %51 = arith.mulf %4, %4 : vector<32x4xf32>
    %cst_17 = arith.constant dense<0.000000e+00> : vector<8x4xf32>
    %52 = tpu.matmul %50, %51, %cst_17 {dimension_numbers = #tpu.dot_dimension_numbers<[1], [0], [0], [1], [0, 0, 1, 1], [], []>} : vector<8x32xf32>, vector<32x4xf32>, vector<8x4xf32> -> vector<8x4xf32>
    %53 = arith.subf %4, %47 : vector<32x4xf32>
    %54 = arith.mulf %53, %53 : vector<32x4xf32>
    %55 = vector.shape_cast %54 : vector<32x4xf32> to vector<1x32x4xf32>
    %cst_18 = arith.constant dense<0.000000e+00> : vector<1xf32>
    %56 = vector.multi_reduction <add>, %55, %cst_18 [1, 2] : vector<1x32x4xf32> to vector<1xf32>
    %57 = vector.shape_cast %56 : vector<1xf32> to vector<1x1x1xf32>
    %58 = vector.extract %57[0, 0, 0] : f32 from vector<1x1x1xf32>
    %59 = vector.broadcast %58 : f32 to vector<1x1xf32>
    %60 = arith.subf %4, %48 : vector<32x4xf32>
    %61 = arith.mulf %60, %60 : vector<32x4xf32>
    %62 = vector.shape_cast %61 : vector<32x4xf32> to vector<1x32x4xf32>
    %cst_19 = arith.constant dense<0.000000e+00> : vector<1xf32>
    %63 = vector.multi_reduction <add>, %62, %cst_19 [1, 2] : vector<1x32x4xf32> to vector<1xf32>
    %64 = vector.shape_cast %63 : vector<1xf32> to vector<1x1x1xf32>
    %65 = vector.extract %64[0, 0, 0] : f32 from vector<1x1x1xf32>
    %66 = vector.broadcast %65 : f32 to vector<1x1xf32>
    %67 = arith.mulf %49, %49 : vector<8x4xf32>
    %68 = vector.broadcast %6 : vector<8x1xf32> to vector<8x4xf32>
    %69 = arith.mulf %67, %68 : vector<8x4xf32>
    %70 = arith.subf %52, %69 : vector<8x4xf32>
    %71 = vector.broadcast %7 : vector<8x1xf32> to vector<8x4xf32>
    %72 = arith.mulf %70, %71 : vector<8x4xf32>
    %73 = vector.shape_cast %72 : vector<8x4xf32> to vector<1x8x4xf32>
    %cst_20 = arith.constant dense<0.000000e+00> : vector<1xf32>
    %74 = vector.multi_reduction <add>, %73, %cst_20 [1, 2] : vector<1x8x4xf32> to vector<1xf32>
    %75 = vector.shape_cast %74 : vector<1xf32> to vector<1x1x1xf32>
    %76 = vector.extract %75[0, 0, 0] : f32 from vector<1x1x1xf32>
    %77 = vector.broadcast %76 : f32 to vector<1x1xf32>
    %cst_21 = arith.constant 5.000000e-01 : f32
    %78 = vector.broadcast %cst_21 : f32 to vector<1x1xf32>
    %79 = arith.mulf %78, %66 : vector<1x1xf32>
    %80 = arith.addf %59, %79 : vector<1x1xf32>
    %cst_22 = arith.constant 3.000000e-01 : f32
    %81 = vector.broadcast %cst_22 : f32 to vector<1x1xf32>
    %82 = arith.mulf %81, %77 : vector<1x1xf32>
    %83 = arith.addf %80, %82 : vector<1x1xf32>
    %cst_23 = arith.constant 7.812500e-03 : f32
    %84 = vector.broadcast %cst_23 : f32 to vector<1x1xf32>
    %85 = arith.mulf %83, %84 : vector<1x1xf32>
    %cst_24 = arith.constant dense<0.000000e+00> : vector<32xf32>
    %86 = vector.multi_reduction <add>, %4, %cst_24 [1] : vector<32x4xf32> to vector<32xf32>
    %87 = vector.shape_cast %86 : vector<32xf32> to vector<32x1xf32>
    %cst_25 = arith.constant 8.000000e+01 : f32
    %88 = vector.broadcast %cst_25 : f32 to vector<32x1xf32>
    %89 = arith.subf %87, %88 : vector<32x1xf32>
    %cst_26 = arith.constant 0.000000e+00 : f32
    %90 = vector.broadcast %cst_26 : f32 to vector<32x1xf32>
    %91 = arith.maximumf %89, %90 : vector<32x1xf32>
    %92 = vector.shape_cast %91 : vector<32x1xf32> to vector<1x32x1xf32>
    %cst_27 = arith.constant dense<0.000000e+00> : vector<1xf32>
    %93 = vector.multi_reduction <add>, %92, %cst_27 [1, 2] : vector<1x32x1xf32> to vector<1xf32>
    %94 = vector.shape_cast %93 : vector<1xf32> to vector<1x1x1xf32>
    %95 = vector.extract %94[0, 0, 0] : f32 from vector<1x1x1xf32>
    %96 = vector.broadcast %95 : f32 to vector<1x1xf32>
    %cst_28 = arith.constant 3.125000e-02 : f32
    %97 = vector.broadcast %cst_28 : f32 to vector<1x1xf32>
    %98 = arith.mulf %96, %97 : vector<1x1xf32>
    %99 = vector.extract_strided_slice %4 {offsets = [0, 2], sizes = [32, 1], strides = [1, 1]} : vector<32x4xf32> to vector<32x1xf32>
    %100 = vector.extract_strided_slice %4 {offsets = [0, 0], sizes = [32, 1], strides = [1, 1]} : vector<32x4xf32> to vector<32x1xf32>
    %101 = vector.extract_strided_slice %4 {offsets = [0, 1], sizes = [32, 1], strides = [1, 1]} : vector<32x4xf32> to vector<32x1xf32>
    %102 = arith.maximumf %100, %101 : vector<32x1xf32>
    %103 = vector.extract_strided_slice %4 {offsets = [0, 3], sizes = [32, 1], strides = [1, 1]} : vector<32x4xf32> to vector<32x1xf32>
    %104 = arith.maximumf %102, %103 : vector<32x1xf32>
    %cst_29 = arith.constant 2.000000e+00 : f32
    %105 = vector.broadcast %cst_29 : f32 to vector<32x1xf32>
    %106 = arith.mulf %105, %99 : vector<32x1xf32>
    %107 = arith.subf %104, %106 : vector<32x1xf32>
    %cst_30 = arith.constant 0.000000e+00 : f32
    %108 = vector.broadcast %cst_30 : f32 to vector<32x1xf32>
    %109 = arith.maximumf %107, %108 : vector<32x1xf32>
    %110 = vector.shape_cast %109 : vector<32x1xf32> to vector<1x32x1xf32>
    %cst_31 = arith.constant dense<0.000000e+00> : vector<1xf32>
    %111 = vector.multi_reduction <add>, %110, %cst_31 [1, 2] : vector<1x32x1xf32> to vector<1xf32>
    %112 = vector.shape_cast %111 : vector<1xf32> to vector<1x1x1xf32>
    %113 = vector.extract %112[0, 0, 0] : f32 from vector<1x1x1xf32>
    %114 = vector.broadcast %113 : f32 to vector<1x1xf32>
    %cst_32 = arith.constant 3.125000e-02 : f32
    %115 = vector.broadcast %cst_32 : f32 to vector<1x1xf32>
    %116 = arith.mulf %114, %115 : vector<1x1xf32>
    %117 = arith.mulf %5, %5 : vector<32x1xf32>
    %118 = vector.shape_cast %117 : vector<32x1xf32> to vector<1x32x1xf32>
    %cst_33 = arith.constant dense<0.000000e+00> : vector<1xf32>
    %119 = vector.multi_reduction <add>, %118, %cst_33 [1, 2] : vector<1x32x1xf32> to vector<1xf32>
    %120 = vector.shape_cast %119 : vector<1xf32> to vector<1x1x1xf32>
    %121 = vector.extract %120[0, 0, 0] : f32 from vector<1x1x1xf32>
    %122 = vector.broadcast %121 : f32 to vector<1x1xf32>
    %cst_34 = arith.constant 3.125000e-03 : f32
    %123 = vector.broadcast %cst_34 : f32 to vector<1x1xf32>
    %124 = arith.mulf %122, %123 : vector<1x1xf32>
    %125 = arith.addf %98, %116 : vector<1x1xf32>
    %126 = arith.addf %125, %124 : vector<1x1xf32>
    %cst_35 = arith.constant 2.000000e-01 : f32
    %127 = vector.broadcast %cst_35 : f32 to vector<1x1xf32>
    %128 = arith.mulf %127, %85 : vector<1x1xf32>
    %129 = arith.addf %18, %128 : vector<1x1xf32>
    %cst_36 = arith.constant 5.000000e-02 : f32
    %130 = vector.broadcast %cst_36 : f32 to vector<1x1xf32>
    %131 = arith.mulf %130, %126 : vector<1x1xf32>
    %132 = arith.addf %129, %131 : vector<1x1xf32>
    %cst_37 = arith.constant 1.000000e-01 : f32
    %133 = vector.broadcast %cst_37 : f32 to vector<1x1xf32>
    %134 = arith.mulf %133, %45 : vector<1x1xf32>
    %135 = arith.addf %132, %134 : vector<1x1xf32>
    %136 = tpu.iota {dimensions = array<i32: 1>} : vector<1x128xi32>
    %c0_i32 = arith.constant 0 : i32
    %137 = vector.broadcast %c0_i32 : i32 to vector<1x128xi32>
    %138 = arith.cmpi eq, %136, %137 : vector<1x128xi32>
    %cst_38 = arith.constant 0.000000e+00 : f32
    %139 = vector.shape_cast %135 : vector<1x1xf32> to vector<1x1xf32>
    %140 = vector.broadcast %139 : vector<1x1xf32> to vector<1x128xf32>
    %141 = vector.broadcast %cst_38 : f32 to vector<1x128xf32>
    %142 = arith.select %138, %140, %141 : vector<1x128xi1>, vector<1x128xf32>
    %c1_i32_39 = arith.constant 1 : i32
    %143 = vector.broadcast %c1_i32_39 : i32 to vector<1x128xi32>
    %144 = arith.cmpi eq, %136, %143 : vector<1x128xi32>
    %cst_40 = arith.constant 0.000000e+00 : f32
    %145 = vector.shape_cast %18 : vector<1x1xf32> to vector<1x1xf32>
    %146 = vector.broadcast %145 : vector<1x1xf32> to vector<1x128xf32>
    %147 = vector.broadcast %cst_40 : f32 to vector<1x128xf32>
    %148 = arith.select %144, %146, %147 : vector<1x128xi1>, vector<1x128xf32>
    %149 = arith.addf %142, %148 : vector<1x128xf32>
    %c2_i32 = arith.constant 2 : i32
    %150 = vector.broadcast %c2_i32 : i32 to vector<1x128xi32>
    %151 = arith.cmpi eq, %136, %150 : vector<1x128xi32>
    %cst_41 = arith.constant 0.000000e+00 : f32
    %152 = vector.shape_cast %85 : vector<1x1xf32> to vector<1x1xf32>
    %153 = vector.broadcast %152 : vector<1x1xf32> to vector<1x128xf32>
    %154 = vector.broadcast %cst_41 : f32 to vector<1x128xf32>
    %155 = arith.select %151, %153, %154 : vector<1x128xi1>, vector<1x128xf32>
    %156 = arith.addf %149, %155 : vector<1x128xf32>
    %c3_i32 = arith.constant 3 : i32
    %157 = vector.broadcast %c3_i32 : i32 to vector<1x128xi32>
    %158 = arith.cmpi eq, %136, %157 : vector<1x128xi32>
    %cst_42 = arith.constant 0.000000e+00 : f32
    %159 = vector.shape_cast %126 : vector<1x1xf32> to vector<1x1xf32>
    %160 = vector.broadcast %159 : vector<1x1xf32> to vector<1x128xf32>
    %161 = vector.broadcast %cst_42 : f32 to vector<1x128xf32>
    %162 = arith.select %158, %160, %161 : vector<1x128xi1>, vector<1x128xf32>
    %163 = arith.addf %156, %162 : vector<1x128xf32>
    %c4_i32 = arith.constant 4 : i32
    %164 = vector.broadcast %c4_i32 : i32 to vector<1x128xi32>
    %165 = arith.cmpi eq, %136, %164 : vector<1x128xi32>
    %cst_43 = arith.constant 0.000000e+00 : f32
    %166 = vector.shape_cast %45 : vector<1x1xf32> to vector<1x1xf32>
    %167 = vector.broadcast %166 : vector<1x1xf32> to vector<1x128xf32>
    %168 = vector.broadcast %cst_43 : f32 to vector<1x128xf32>
    %169 = arith.select %165, %167, %168 : vector<1x128xi1>, vector<1x128xf32>
    %170 = arith.addf %163, %169 : vector<1x128xf32>
    %c0_44 = arith.constant 0 : index
    %c0_45 = arith.constant 0 : index
    %171 = vector.load %arg4[%c0_44, %c0_45] : memref<1x128xf32, #tpu.memory_space<vmem>>, vector<1x128xf32>
    tpu.vector_store %arg4[%c0_44, %c0_45], %170 {strides = array<i32>} : memref<1x128xf32, #tpu.memory_space<vmem>>, vector<1x128xf32>,
    return
  }
}

</mosaic_0001>

<llo_original>
// kernel: tpu_custom_call.1
$region0: #{tpu_custom_call.1}
  #allocation0 [shape = 'u32[]', space=smem, size = 0x4, offset = 0x4, fixed_abs, tag = 'smem constant byte address 0x4 - core index']
  #allocation1 [shape = 'u32[72,128]{1,0:T(1,128)}', space=vmem, size = 0x9000, scoped, tag = 'internal scratch']
  %s0 = inlined_call_operand.vmem [shape: f32[32,128], index: 0, kind: input, shape index: {}]
  %s1 = inlined_call_operand.vmem [shape: f32[32,128], index: 1, kind: input, shape index: {}]
  %s2 = inlined_call_operand.vmem [shape: f32[32,7], index: 2, kind: input, shape index: {}]
  %s3 = inlined_call_operand.vmem [shape: f32[72,32], index: 3, kind: input, shape index: {}]
  %s4 = inlined_call_operand.hbm [shape: f32[1,128], index: 4, kind: output, shape index: {}]
  %s5 = sld [smem:[#allocation0]]
  $region26: #{tpu_custom_call.1} parent=0
    _
  %s7 = ssub.s32 1, %s5
  %s8 = scalar_select 0, %s7, %s5
  $region1: #{tpu_custom_call.1} parent=0
    #allocation2 [shape = 'u8[512]{0}', space=vmem, size = 0x400, scoped, tag = 'output window, operand 0, single buffered']
    #allocation3 [shape = 's32[1]{0}', space=sflag, size = 0x4, scoped, tag = 'scoped memory for tpu_custom_call.1']
    %9 = vsyncpa [#allocation3], 0
    // Predicated region
    $region2: #{tpu_custom_call.1} parent=1 // pred_check
      _
    $region3: #{tpu_custom_call.1} parent=1 // pred_check_branch
      %11 = sbr.rel (0) target = $region5
    $region4: #{tpu_custom_call.1} parent=1 // pred_region
      _
    $region5: #{tpu_custom_call.1} parent=1 // pred_fallthru
      _
    // Predicated region
    $region6: #{tpu_custom_call.1} parent=1 // pred_check
      _
    $region7: #{tpu_custom_call.1} parent=1 // pred_check_branch
      %13 = sbr.rel (0) target = $region9
    $region8: #{tpu_custom_call.1} parent=1 // pred_region
      _
    $region9: #{tpu_custom_call.1} parent=1 // pred_fallthru
      _
    // Predicated region
    $region10: #{tpu_custom_call.1} parent=1 // pred_check
      _
    $region11: #{tpu_custom_call.1} parent=1 // pred_check_branch
      %15 = sbr.rel (0) target = $region13
    $region12: #{tpu_custom_call.1} parent=1 // pred_region
      _
    $region13: #{tpu_custom_call.1} parent=1 // pred_fallthru
      _
    // Predicated region
    $region14: #{tpu_custom_call.1} parent=1 // pred_check
      _
    $region15: #{tpu_custom_call.1} parent=1 // pred_check_branch
      %17 = sbr.rel (0) target = $region17
    $region16: #{tpu_custom_call.1} parent=1 // pred_region
      _
    $region17: #{tpu_custom_call.1} parent=1 // pred_fallthru
      _
    %v18 = vld [vmem:[%s0] sm:$0xff]
    %v19 = vld [vmem:[%s0 + $0x8] sm:$0xff]
    %v20 = vld [vmem:[%s0 + $0x10] sm:$0xff]
    %v21 = vld [vmem:[%s0 + $0x18] sm:$0xff]
    %v22 = vld [vmem:[%s1] sm:$0xff]
    %v23 = vld [vmem:[%s1 + $0x8] sm:$0xff]
    %v24 = vld [vmem:[%s1 + $0x10] sm:$0xff]
    %v25 = vld [vmem:[%s1 + $0x18] sm:$0xff]
    %v26 = vld [vmem:[%s2] sm:$0xff]
    %v27 = vld [vmem:[%s2 + $0x8] sm:$0xff]
    %v28 = vld [vmem:[%s2 + $0x10] sm:$0xff]
    %v29 = vld [vmem:[%s2 + $0x18] sm:$0xff]
    %v30 = vld [vmem:[%s3] sm:$0xff]
    %v31 = vld [vmem:[%s3 + $0x8] sm:$0xff]
    %v32 = vld [vmem:[%s3 + $0x10] sm:$0xff]
    %v33 = vld [vmem:[%s3 + $0x18] sm:$0xff]
    %v34 = vld [vmem:[%s3 + $0x20] sm:$0xff]
    %v35 = vld [vmem:[%s3 + $0x28] sm:$0xff]
    %v36 = vld [vmem:[%s3 + $0x30] sm:$0xff]
    %v37 = vld [vmem:[%s3 + $0x38] sm:$0xff]
    %v38 = vld [vmem:[%s3 + $0x40] sm:$0xff]
    %v39 = vsub.f32 %v18, %v22
    %v40 = vsub.f32 %v19, %v23
    %v41 = vsub.f32 %v20, %v24
    %v42 = vsub.f32 %v21, %v25
    %v43 = vand.u32 2147483647, %v39
    %v44 = vand.u32 2147483647, %v40
    %v45 = vand.u32 2147483647, %v41
    %v46 = vand.u32 2147483647, %v42
    %47 = vadd.xlane.f32.xlu0 %v43
    %v48 = vpop.xlane.xlu0 %47
    %49 = vadd.xlane.f32.xlu0 %v44
    %v50 = vpop.xlane.xlu0 %49
    %51 = vadd.xlane.f32.xlu0 %v45
    %v52 = vpop.xlane.xlu0 %51
    %53 = vadd.xlane.f32.xlu0 %v46
    %v54 = vpop.xlane.xlu0 %53
    %vm55 = vcmask 7168
    %v56 = vsel %vm55, %v48, 0.0
    %v57 = vsel %vm55, %v50, 0.0
    %v58 = vadd.f32 %v56, %v57
    %v59 = vsel %vm55, %v52, 0.0
    %v60 = vadd.f32 %v58, %v59
    %v61 = vsel %vm55, %v54, 0.0
    %v62 = vadd.f32 %v60, %v61
    %63 = vadd.xlane.f32.xlu0 %v62
    %v64 = vpop.xlane.xlu0 %63
    %v65 = vrot.slane %v64, 4
    %v66 = vadd.f32 %v64, %v65
    %v67 = vrot.slane %v66, 2
    %v68 = vadd.f32 %v66, %v67
    %v69 = vrot.slane %v68, 1
    %v70 = vadd.f32 %v68, %v69
    %s71 = vtos %v70
    %v72 = vstv %s71
    %v73 = vmul.f32 %v72, 0.00024414063
    %74 = vrot.lane.b32.xlu0 %v18, 1
    %v75 = vpop.permute.xlu0 %74
    %76 = vrot.lane.b32.xlu0 %v19, 1
    %v77 = vpop.permute.xlu0 %76
    %78 = vrot.lane.b32.xlu0 %v20, 1
    %v79 = vpop.permute.xlu0 %78
    %80 = vrot.lane.b32.xlu0 %v21, 1
    %v81 = vpop.permute.xlu0 %80
    %v82 = vsub.f32 %v75, %v18
    %v83 = vsub.f32 %v77, %v19
    %v84 = vsub.f32 %v79, %v20
    %v85 = vsub.f32 %v81, %v21
    %90 = vrot.lane.b32.xlu0 %v18, 127
    %v91 = vpop.permute.xlu0 %90
    %92 = vrot.lane.b32.xlu0 %v19, 127
    %v93 = vpop.permute.xlu0 %92
    %94 = vrot.lane.b32.xlu0 %v20, 127
    %v95 = vpop.permute.xlu0 %94
    %96 = vrot.lane.b32.xlu0 %v21, 127
    %v97 = vpop.permute.xlu0 %96
    %v102 = vsub.f32 %v18, %v91
    %v103 = vsub.f32 %v19, %v93
    %v104 = vsub.f32 %v20, %v95
    %v105 = vsub.f32 %v21, %v97
    %v106 = vmul.f32 %v82, %v82
    %v107 = vmul.f32 %v83, %v83
    %v108 = vmul.f32 %v84, %v84
    %v109 = vmul.f32 %v85, %v85
    %110 = vadd.xlane.f32.xlu0 %v106
    %v111 = vpop.xlane.xlu0 %110
    %112 = vadd.xlane.f32.xlu0 %v107
    %v113 = vpop.xlane.xlu0 %112
    %114 = vadd.xlane.f32.xlu0 %v108
    %v115 = vpop.xlane.xlu0 %114
    %116 = vadd.xlane.f32.xlu0 %v109
    %v117 = vpop.xlane.xlu0 %116
    %v118 = vmul.f32 %v102, %v102
    %v119 = vmul.f32 %v103, %v103
    %v120 = vmul.f32 %v104, %v104
    %v121 = vmul.f32 %v105, %v105
    %v122 = vsub.f32 %v111, %v118
    %v123 = vsub.f32 %v113, %v119
    %v124 = vsub.f32 %v115, %v120
    %v125 = vsub.f32 %v117, %v121
    %v126 = vmul.f32 %v118, 0.007874016
    %v127 = vmul.f32 %v119, 0.007874016
    %v128 = vmul.f32 %v120, 0.007874016
    %v129 = vmul.f32 %v121, 0.007874016
    %v130 = vsub.f32 %v122, %v126
    %v131 = vsub.f32 %v123, %v127
    %v132 = vsub.f32 %v124, %v128
    %v133 = vsub.f32 %v125, %v129
    %v134 = vmul.f32 %v130, 0.007936508
    %v135 = vmul.f32 %v131, 0.007936508
    %v136 = vmul.f32 %v132, 0.007936508
    %v137 = vmul.f32 %v133, 0.007936508
    %v138 = vsub.f32 %v134, 10.0
    %v139 = vsub.f32 %v135, 10.0
    %v140 = vsub.f32 %v136, 10.0
    %v141 = vsub.f32 %v137, 10.0
    %v142 = vmax.f32 %v138, 0.0
    %v143 = vmax.f32 %v139, 0.0
    %v144 = vmax.f32 %v140, 0.0
    %v145 = vmax.f32 %v141, 0.0
    %150 = vrot.lane.b32.xlu0 %v142, 1
    %v151 = vpop.permute.xlu0 %150
    %152 = vrot.lane.b32.xlu0 %v143, 1
    %v153 = vpop.permute.xlu0 %152
    %154 = vrot.lane.b32.xlu0 %v144, 1
    %v155 = vpop.permute.xlu0 %154
    %156 = vrot.lane.b32.xlu0 %v145, 1
    %v157 = vpop.permute.xlu0 %156
    %v162 = vsel %vm55, %v151, 0.0
    %v163 = vsel %vm55, %v153, 0.0
    %v164 = vadd.f32 %v162, %v163
    %v165 = vsel %vm55, %v155, 0.0
    %v166 = vadd.f32 %v164, %v165
    %v167 = vsel %vm55, %v157, 0.0
    %v168 = vadd.f32 %v166, %v167
    %169 = vadd.xlane.f32.xlu0 %v168
    %v170 = vpop.xlane.xlu0 %169
    %v171 = vrot.slane %v170, 4
    %v172 = vadd.f32 %v170, %v171
    %v173 = vrot.slane %v172, 2
    %v174 = vadd.f32 %v172, %v173
    %v175 = vrot.slane %v174, 1
    %v176 = vadd.f32 %v174, %v175
    %s177 = vtos %v176
    %v178 = vstv %s177
    %v179 = vmul.f32 %v178, 0.03125
    %vm180 = vcmask 261120
    %v182 = vsel %vm180, %v30, 0
    %v185 = vsel %vm180, %v31, 0
    %v188 = vsel %vm180, %v32, 0
    %v191 = vsel %vm180, %v33, 0
    %v194 = vsel %vm180, %v34, 0
    %v197 = vsel %vm180, %v35, 0
    %v200 = vsel %vm180, %v36, 0
    %v203 = vsel %vm180, %v37, 0
    %v206 = vsel %vm180, %v38, 0
    %208 = vmatpush.msra.mxu0 0.0
    %209 = vmatpush.msra.mxu0 0.0
    %210 = vmatpush.msra.mxu0 0.0
    %211 = vmatpush.msra.mxu0 0.0
    %212 = vmatpush.msra.mxu0 0.0
    %213 = vmatpush.msra.mxu0 0.0
    %214 = vmatpush.msra.mxu0 0.0
    %215 = vmatpush.msra.mxu0 0.0
    %216 = vmatpush.msra.mxu0 0.0
    %217 = vmatpush.msra.mxu0 0.0
    %218 = vmatpush.msra.mxu0 0.0
    %219 = vmatpush.msra.mxu0 0.0
    %220 = vmatpush.msra.mxu0 %v29
    %221 = vmatpush.msra.mxu0 %v28
    %222 = vmatpush.msra.mxu0 %v27
    %223 = vmatpush.msra.mxu0 %v26
    %224 = vmatmul.f32.gmra.mxu0 %v182
    %v225 = vpop.f32.mrf.mxu0
    %v226 = vadd.f32 0.0, %v225
    %227 = vmatmul.f32.gmra.mxu0 %v185
    %v228 = vpop.f32.mrf.mxu0
    %v229 = vadd.f32 0.0, %v228
    %230 = vmatmul.f32.gmra.mxu0 %v188
    %v231 = vpop.f32.mrf.mxu0
    %v232 = vadd.f32 0.0, %v231
    %233 = vmatmul.f32.gmra.mxu0 %v191
    %v234 = vpop.f32.mrf.mxu0
    %v235 = vadd.f32 0.0, %v234
    %236 = vmatmul.f32.gmra.mxu0 %v194
    %v237 = vpop.f32.mrf.mxu0
    %v238 = vadd.f32 0.0, %v237
    %239 = vmatmul.f32.gmra.mxu0 %v197
    %v240 = vpop.f32.mrf.mxu0
    %v241 = vadd.f32 0.0, %v240
    %242 = vmatmul.f32.gmra.mxu0 %v200
    %v243 = vpop.f32.mrf.mxu0
    %v244 = vadd.f32 0.0, %v243
    %245 = vmatmul.f32.gmra.mxu0 %v203
    %v246 = vpop.f32.mrf.mxu0
    %v247 = vadd.f32 0.0, %v246
    %248 = vmatmul.f32.gmra.mxu0 %v206
    %v249 = vpop.f32.mrf.mxu0
    %v250 = vadd.f32 0.0, %v249
    %251 = vdwg.mxu0
    %v252 = vmul.f32 %v26, %v26
    %v253 = vmul.f32 %v27, %v27
    %v254 = vmul.f32 %v28, %v28
    %v255 = vmul.f32 %v29, %v29
    %256 = vmatpush.msra.mxu0 0.0
    %257 = vmatpush.msra.mxu0 0.0
    %258 = vmatpush.msra.mxu0 0.0
    %259 = vmatpush.msra.mxu0 0.0
    %260 = vmatpush.msra.mxu0 0.0
    %261 = vmatpush.msra.mxu0 0.0
    %262 = vmatpush.msra.mxu0 0.0
    %263 = vmatpush.msra.mxu0 0.0
    %264 = vmatpush.msra.mxu0 0.0
    %265 = vmatpush.msra.mxu0 0.0
    %266 = vmatpush.msra.mxu0 0.0
    %267 = vmatpush.msra.mxu0 0.0
    %268 = vmatpush.msra.mxu0 %v255
    %269 = vmatpush.msra.mxu0 %v254
    %270 = vmatpush.msra.mxu0 %v253
    %271 = vmatpush.msra.mxu0 %v252
    %272 = vmatmul.f32.gmra.mxu0 %v206
    %v273 = vpop.f32.mrf.mxu0
    %v274 = vadd.f32 0.0, %v273
    %275 = vdwg.mxu0
    %v276 = vsub.f32 %v26, %v226
    %v277 = vsub.f32 %v27, %v229
    %v278 = vsub.f32 %v28, %v232
    %v279 = vsub.f32 %v29, %v235
    %v280 = vmul.f32 %v276, %v276
    %v281 = vmul.f32 %v277, %v277
    %v282 = vmul.f32 %v278, %v278
    %v283 = vmul.f32 %v279, %v279
    %vm284 = vcmask 31744
    %v285 = vsel %vm284, %v280, 0.0
    %v286 = vsel %vm284, %v281, 0.0
    %v287 = vadd.f32 %v285, %v286
    %v288 = vsel %vm284, %v282, 0.0
    %v289 = vadd.f32 %v287, %v288
    %v290 = vsel %vm284, %v283, 0.0
    %v291 = vadd.f32 %v289, %v290
    %292 = vadd.xlane.f32.xlu0 %v291
    %v293 = vpop.xlane.xlu0 %292
    %v294 = vrot.slane %v293, 4
    %v295 = vadd.f32 %v293, %v294
    %v296 = vrot.slane %v295, 2
    %v297 = vadd.f32 %v295, %v296
    %v298 = vrot.slane %v297, 1
    %v299 = vadd.f32 %v297, %v298
    %s300 = vtos %v299
    %v301 = vstv %s300
    %v302 = vsub.f32 %v26, %v238
    %v303 = vsub.f32 %v27, %v241
    %v304 = vsub.f32 %v28, %v244
    %v305 = vsub.f32 %v29, %v247
    %v306 = vmul.f32 %v302, %v302
    %v307 = vmul.f32 %v303, %v303
    %v308 = vmul.f32 %v304, %v304
    %v309 = vmul.f32 %v305, %v305
    %v310 = vsel %vm284, %v306, 0.0
    %v311 = vsel %vm284, %v307, 0.0
    %v312 = vadd.f32 %v310, %v311
    %v313 = vsel %vm284, %v308, 0.0
    %v314 = vadd.f32 %v312, %v313
    %v315 = vsel %vm284, %v309, 0.0
    %v316 = vadd.f32 %v314, %v315
    %317 = vadd.xlane.f32.xlu0 %v316
    %v318 = vpop.xlane.xlu0 %317
    %v319 = vrot.slane %v318, 4
    %v320 = vadd.f32 %v318, %v319
    %v321 = vrot.slane %v320, 2
    %v322 = vadd.f32 %v320, %v321
    %v323 = vrot.slane %v322, 1
    %v324 = vadd.f32 %v322, %v323
    %s325 = vtos %v324
    %v326 = vstv %s325
    %v327 = vmul.f32 %v250, %v250
    %329 = vset.pattern.permute.xlu0 5
    %330 = vperm.xlu0 %329, %v26
    %v331 = vpop.permute.xlu0 %330
    %v333 = vmul.f32 %v327, %v331
    %v334 = vsub.f32 %v274, %v333
    %335 = vset.pattern.permute.xlu0 6
    %336 = vperm.xlu0 %335, %v26
    %v337 = vpop.permute.xlu0 %336
    %v339 = vmul.f32 %v334, %v337
    %v340 = vsel %vm284, %v339, 0.0
    %341 = vadd.xlane.f32.xlu0 %v340
    %v342 = vpop.xlane.xlu0 %341
    %v343 = vrot.slane %v342, 4
    %v344 = vadd.f32 %v342, %v343
    %v345 = vrot.slane %v344, 2
    %v346 = vadd.f32 %v344, %v345
    %v347 = vrot.slane %v346, 1
    %v348 = vadd.f32 %v346, %v347
    %s349 = vtos %v348
    %v350 = vstv %s349
    %v351 = vmul.f32 %v326, 0.5
    %v352 = vadd.f32 %v301, %v351
    %v353 = vmul.f32 %v350, 0.3
    %v354 = vadd.f32 %v352, %v353
    %v355 = vmul.f32 %v354, 0.0078125
    %v356 = vsel %vm284, %v26, 0.0
    %357 = vadd.xlane.f32.xlu0 %v356
    %v358 = vpop.xlane.xlu0 %357
    %v359 = vsel %vm284, %v27, 0.0
    %360 = vadd.xlane.f32.xlu0 %v359
    %v361 = vpop.xlane.xlu0 %360
    %v362 = vsel %vm284, %v28, 0.0
    %363 = vadd.xlane.f32.xlu0 %v362
    %v364 = vpop.xlane.xlu0 %363
    %v365 = vsel %vm284, %v29, 0.0
    %366 = vadd.xlane.f32.xlu0 %v365
    %v367 = vpop.xlane.xlu0 %366
    %v368 = vsub.f32 %v358, 80.0
    %v369 = vsub.f32 %v361, 80.0
    %v370 = vsub.f32 %v364, 80.0
    %v371 = vsub.f32 %v367, 80.0
    %v372 = vmax.f32 %v368, 0.0
    %v373 = vmax.f32 %v369, 0.0
    %v374 = vmax.f32 %v370, 0.0
    %v375 = vmax.f32 %v371, 0.0
    %v376 = vsel %vm55, %v372, 0.0
    %v377 = vsel %vm55, %v373, 0.0
    %v378 = vadd.f32 %v376, %v377
    %v379 = vsel %vm55, %v374, 0.0
    %v380 = vadd.f32 %v378, %v379
    %v381 = vsel %vm55, %v375, 0.0
    %v382 = vadd.f32 %v380, %v381
    %383 = vadd.xlane.f32.xlu0 %v382
    %v384 = vpop.xlane.xlu0 %383
    %v385 = vrot.slane %v384, 4
    %v386 = vadd.f32 %v384, %v385
    %v387 = vrot.slane %v386, 2
    %v388 = vadd.f32 %v386, %v387
    %v389 = vrot.slane %v388, 1
    %v390 = vadd.f32 %v388, %v389
    %s391 = vtos %v390
    %v392 = vstv %s391
    %v393 = vmul.f32 %v392, 0.03125
    %397 = vrot.lane.b32.xlu0 %v26, 127
    %v398 = vpop.permute.xlu0 %397
    %399 = vrot.lane.b32.xlu0 %v27, 127
    %v400 = vpop.permute.xlu0 %399
    %401 = vrot.lane.b32.xlu0 %v28, 127
    %v402 = vpop.permute.xlu0 %401
    %403 = vrot.lane.b32.xlu0 %v29, 127
    %v404 = vpop.permute.xlu0 %403
    %v409 = vmax.f32 %v26, %v398
    %v410 = vmax.f32 %v27, %v400
    %v411 = vmax.f32 %v28, %v402
    %v412 = vmax.f32 %v29, %v404
    %413 = vrot.lane.b32.xlu0 %v26, 125
    %v414 = vpop.permute.xlu0 %413
    %415 = vrot.lane.b32.xlu0 %v27, 125
    %v416 = vpop.permute.xlu0 %415
    %417 = vrot.lane.b32.xlu0 %v28, 125
    %v418 = vpop.permute.xlu0 %417
    %419 = vrot.lane.b32.xlu0 %v29, 125
    %v420 = vpop.permute.xlu0 %419
    %v425 = vmax.f32 %v409, %v414
    %v426 = vmax.f32 %v410, %v416
    %v427 = vmax.f32 %v411, %v418
    %v428 = vmax.f32 %v412, %v420
    %v429 = vmul.f32 %v26, 2.0
    %v430 = vmul.f32 %v27, 2.0
    %v431 = vmul.f32 %v28, 2.0
    %v432 = vmul.f32 %v29, 2.0
    %437 = vrot.lane.b32.xlu0 %v429, 126
    %v438 = vpop.permute.xlu0 %437
    %439 = vrot.lane.b32.xlu0 %v430, 126
    %v440 = vpop.permute.xlu0 %439
    %441 = vrot.lane.b32.xlu0 %v431, 126
    %v442 = vpop.permute.xlu0 %441
    %443 = vrot.lane.b32.xlu0 %v432, 126
    %v444 = vpop.permute.xlu0 %443
    %v449 = vsub.f32 %v425, %v438
    %v450 = vsub.f32 %v426, %v440
    %v451 = vsub.f32 %v427, %v442
    %v452 = vsub.f32 %v428, %v444
    %v453 = vmax.f32 %v449, 0.0
    %v454 = vmax.f32 %v450, 0.0
    %v455 = vmax.f32 %v451, 0.0
    %v456 = vmax.f32 %v452, 0.0
    %v457 = vsel %vm55, %v453, 0.0
    %v458 = vsel %vm55, %v454, 0.0
    %v459 = vadd.f32 %v457, %v458
    %v460 = vsel %vm55, %v455, 0.0
    %v461 = vadd.f32 %v459, %v460
    %v462 = vsel %vm55, %v456, 0.0
    %v463 = vadd.f32 %v461, %v462
    %464 = vadd.xlane.f32.xlu0 %v463
    %v465 = vpop.xlane.xlu0 %464
    %v466 = vrot.slane %v465, 4
    %v467 = vadd.f32 %v465, %v466
    %v468 = vrot.slane %v467, 2
    %v469 = vadd.f32 %v467, %v468
    %v470 = vrot.slane %v469, 1
    %v471 = vadd.f32 %v469, %v470
    %s472 = vtos %v471
    %v473 = vstv %s472
    %v474 = vmul.f32 %v473, 0.03125
    %479 = vrot.lane.b32.xlu0 %v252, 124
    %v480 = vpop.permute.xlu0 %479
    %481 = vrot.lane.b32.xlu0 %v253, 124
    %v482 = vpop.permute.xlu0 %481
    %483 = vrot.lane.b32.xlu0 %v254, 124
    %v484 = vpop.permute.xlu0 %483
    %485 = vrot.lane.b32.xlu0 %v255, 124
    %v486 = vpop.permute.xlu0 %485
    %v491 = vsel %vm55, %v480, 0.0
    %v492 = vsel %vm55, %v482, 0.0
    %v493 = vadd.f32 %v491, %v492
    %v494 = vsel %vm55, %v484, 0.0
    %v495 = vadd.f32 %v493, %v494
    %v496 = vsel %vm55, %v486, 0.0
    %v497 = vadd.f32 %v495, %v496
    %498 = vadd.xlane.f32.xlu0 %v497
    %v499 = vpop.xlane.xlu0 %498
    %v500 = vrot.slane %v499, 4
    %v501 = vadd.f32 %v499, %v500
    %v502 = vrot.slane %v501, 2
    %v503 = vadd.f32 %v501, %v502
    %v504 = vrot.slane %v503, 1
    %v505 = vadd.f32 %v503, %v504
    %s506 = vtos %v505
    %v507 = vstv %s506
    %v508 = vmul.f32 %v507, 0.003125
    %v509 = vadd.f32 %v393, %v474
    %v510 = vadd.f32 %v509, %v508
    %v511 = vmul.f32 %v355, 0.2
    %v512 = vadd.f32 %v73, %v511
    %v513 = vmul.f32 %v510, 0.05
    %v514 = vadd.f32 %v512, %v513
    %v515 = vmul.f32 %v179, 0.1
    %v516 = vadd.f32 %v514, %v515
    %v517 = vlaneseq
    %v518 = vand.u32 %v517, 127
    %vm519 = vcmp.eq.s32.totalorder %v518, 0
    %v520 = vsel %vm519, %v516, 0.0
    %vm521 = vcmp.eq.s32.totalorder %v518, 1
    %v522 = vsel %vm521, %v73, 0.0
    %v523 = vadd.f32 %v520, %v522
    %vm524 = vcmp.eq.s32.totalorder %v518, 2
    %v525 = vsel %vm524, %v355, 0.0
    %v526 = vadd.f32 %v523, %v525
    %vm527 = vcmp.eq.s32.totalorder %v518, 3
    %v528 = vsel %vm527, %v510, 0.0
    %v529 = vadd.f32 %v526, %v528
    %vm530 = vcmp.eq.s32.totalorder %v518, 4
    %v531 = vsel %vm530, %v179, 0.0
    %v532 = vadd.f32 %v529, %v531
    %533 = vst [vmem:[#allocation2] sm:$0x1] %v532
    // Predicated region
    $region18: #{tpu_custom_call.1} parent=1 // pred_check
      _
    $region19: #{tpu_custom_call.1} parent=1 // pred_check_branch
      %535 = sbr.rel (0) target = $region21
    $region20: #{tpu_custom_call.1} parent=1 // pred_region
      %537 = vsyncadd [#allocation3], 0
      %s539 = sshll.u32 [#allocation2], 4
      %s540 = int_to_ptr.vmem [resolvable:$true] %s539
      %s541 = sshll.u32 %s4, 4
      %s542 = int_to_ptr.hbm [resolvable:$true] %s541
      %544 = dma.vmem_to_hbm [thread:$0]  %s540, 16, %s542, [#allocation3]
    $region21: #{tpu_custom_call.1} parent=1 // pred_fallthru
      _
    // Predicated region
    $region22: #{tpu_custom_call.1} parent=1 // pred_check
      _
    $region23: #{tpu_custom_call.1} parent=1 // pred_check_branch
      %546 = sbr.rel (0) target = $region25
    $region24: #{tpu_custom_call.1} parent=1 // pred_region
      %548 = dma.done [#allocation3], 16
    $region25: #{tpu_custom_call.1} parent=1 // pred_fallthru
      _
    %549 = vsyncpa [#allocation3], 1

</llo_original>
